<compile_context>
chip_gen: v7x
topology: tpu7x:2x2x1
jax: 0.10.0
libtpu: 0.0.40
codegen_flags: <defaults>
</compile_context>

<pallas_src>
import jax
import jax.numpy as jnp
from jax.experimental import pallas as pl
from jax.experimental.pallas import tpu as pltpu


HIDDEN = 64                 # per-head hidden width (fixed by the module)
VMEM_CAP_BYTES = 48 << 20   # stay well under v7x's 64 MiB physical VMEM


def _round_up(x, m):
    return ((x + m - 1) // m) * m


# --------------------------------------------------------------------------
# Kernel
# --------------------------------------------------------------------------
def _mlp_heads_kernel(x_ref, w1_ref, b1_ref, w2_ref, b2_ref, o_ref):
    # x_ref : (tb, F)        f32 feature tile (cast to bf16 in-kernel)
    # w1_ref: (F, HFP)       bf16, all heads' first-layer weights side by side
    # b1_ref: (1, HFP)       f32
    # w2_ref: (HFP, OUTP)    bf16, block-diagonal second-layer weights
    # b2_ref: (1, OUTP)      f32 (zero beyond out_dim)
    # o_ref : (tb, out_dim)  f32
    out_dim = o_ref.shape[-1]

    # Layer 1: one MXU matmul over all heads, f32 accumulation.
    x = x_ref[...].astype(w1_ref.dtype)                     # in-kernel cast (VPU)
    h = jnp.dot(x, w1_ref[...], preferred_element_type=jnp.float32)
    h = jnp.maximum(h + b1_ref[...], 0.0)                   # bias + ReLU in f32

    # Layer 2: one resident block-diagonal MXU matmul (O(1) epilogue per tile).
    acc = jnp.dot(h.astype(w2_ref.dtype), w2_ref[...],
                  preferred_element_type=jnp.float32)
    acc = acc + b2_ref[...]
    o_ref[...] = acc[:, :out_dim].astype(o_ref.dtype)


# --------------------------------------------------------------------------
# Parameter packing (done once, not per call)
# --------------------------------------------------------------------------
def init_params(key, num_features, out_dim):
    """Per-head raw parameters, PyTorch-Linear-style uniform init."""
    keys = jax.random.split(key, 4 * out_dim)
    bound1 = 1.0 / (num_features ** 0.5)
    bound2 = 1.0 / (HIDDEN ** 0.5)
    w1_list, b1_list, w2_list, b2_list = [], [], [], []
    for h in range(out_dim):
        k1, k2, k3, k4 = keys[4 * h: 4 * h + 4]
        w1_list.append(jax.random.uniform(k1, (num_features, HIDDEN),
                                          jnp.float32, -bound1, bound1))
        b1_list.append(jax.random.uniform(k2, (HIDDEN,), jnp.float32,
                                          -bound1, bound1))
        w2_list.append(jax.random.uniform(k3, (HIDDEN,), jnp.float32,
                                          -bound2, bound2))
        b2_list.append(jax.random.uniform(k4, (), jnp.float32,
                                          -bound2, bound2))
    return (w1_list, b1_list, w2_list, b2_list)


def pack_params(raw_params, num_features, out_dim):
    """Pack per-head params into resident master copies (bf16 weights)."""
    w1_list, b1_list, w2_list, b2_list = raw_params
    hf = out_dim * HIDDEN
    hfp = _round_up(max(hf, 128), 128)        # pad dummy zero heads (odd out_dim)
    outp = _round_up(max(out_dim, 128), 128)  # MXU-friendly layer-2 N

    w1 = jnp.zeros((num_features, hfp), jnp.float32)
    b1 = jnp.zeros((1, hfp), jnp.float32)
    w2bd = jnp.zeros((hfp, outp), jnp.float32)
    b2 = jnp.zeros((1, outp), jnp.float32)
    for hd in range(out_dim):
        lo = hd * HIDDEN
        w1 = w1.at[:, lo:lo + HIDDEN].set(w1_list[hd])
        b1 = b1.at[0, lo:lo + HIDDEN].set(b1_list[hd])
        w2bd = w2bd.at[lo:lo + HIDDEN, hd].set(w2_list[hd])
        b2 = b2.at[0, hd].set(b2_list[hd])

    return dict(w1=w1.astype(jnp.bfloat16),   # bf16 master copies: no per-call cast
                b1=b1,
                w2=w2bd.astype(jnp.bfloat16),
                b2=b2,
                out_dim=out_dim)


# --------------------------------------------------------------------------
# Wrapper
# --------------------------------------------------------------------------
def _choose_tb(batch, per_row_bytes, stream_budget, *, min_steps=1):
    """Largest batch tile whose streamed tiles + f32 temps fit the budget."""
    cap_rows = max(stream_budget // max(per_row_bytes, 1), 8)
    if min_steps <= 1 and batch <= cap_rows:
        return batch                        # one big step: least per-step overhead
    best = None
    t = 8
    while t <= min(batch, cap_rows):
        if batch % t == 0 and (batch // t) >= min_steps:
            best = t
        t += 8
    return best if best is not None else batch   # full-extent tile always legal


def mlp_layer_forward(features, params, *, tb=None, core_parallel=False,
                      single_buffer_weights=True):
    """features: (B, F) float.  Returns (B, out_dim) float32."""
    w1, b1, w2bd, b2 = params["w1"], params["b1"], params["w2"], params["b2"]
    out_dim = params["out_dim"]
    B, F = features.shape
    HFP = w1.shape[1]
    OUTP = w2bd.shape[1]
    assert w1.shape == (F, HFP) and b1.shape == (1, HFP)
    assert w2bd.shape == (HFP, OUTP) and b2.shape == (1, OUTP)

    features = features.astype(jnp.float32)   # stream f32; cast to bf16 in-kernel

    resident = F * HFP * 2 + HFP * 4 + HFP * OUTP * 2 + OUTP * 4
    if not single_buffer_weights:
        resident *= 2
    # Live bytes per batch row per grid step (streamed tiles + f32 temps).
    per_row = (2 * F * 4             # x tile, double-buffered, f32
               + F * 2               # in-kernel bf16 copy of x
               + HFP * 4 + HFP * 2   # h (f32) + bf16 copy for the layer-2 MXU
               + OUTP * 4            # layer-2 f32 accumulator
               + 2 * out_dim * 4)    # output tile, double-buffered
    stream_budget = max(VMEM_CAP_BYTES - resident - (2 << 20), 1 << 20)

    if tb is None:
        tb = _choose_tb(B, per_row, stream_budget,
                        min_steps=2 if core_parallel else 1)
    assert tb == B or (B % tb == 0 and tb % 8 == 0)

    vmem_need = resident + tb * per_row
    vmem_limit = int(min(max(vmem_need + (4 << 20), 16 << 20), VMEM_CAP_BYTES))
    # TODO(synk): if resident W1/W2 alone approach the cap (e.g. F=768,
    # out_dim=512), add an HF grid axis and tile the heads.

    cost = pl.CostEstimate(
        flops=2 * B * F * HFP + 2 * B * HFP * OUTP,
        transcendentals=0,
        bytes_accessed=int(B * F * 4 + F * HFP * 2 + HFP * 4
                           + HFP * OUTP * 2 + OUTP * 4 + B * out_dim * 4),
    )

    # On v7x pass core_parallel=True so both TensorCores split the batch axis.
    sem = (pltpu.CORE_PARALLEL,) if core_parallel else ("parallel",)

    def build_and_run(single_buffer):
        def const_spec(shape):
            if single_buffer:
                return pl.BlockSpec(shape, lambda i: (0, 0),
                                    pipeline_mode=pl.Buffered(1))
            return pl.BlockSpec(shape, lambda i: (0, 0))

        grid_spec = pltpu.PrefetchScalarGridSpec(
            num_scalar_prefetch=0,
            grid=(B // tb,),
            in_specs=[
                pl.BlockSpec((tb, F), lambda i: (i, 0)),   # x tile (streamed)
                const_spec((F, HFP)),                       # W1 (resident)
                const_spec((1, HFP)),                       # b1
                const_spec((HFP, OUTP)),                    # block-diag W2
                const_spec((1, OUTP)),                      # b2 (padded)
            ],
            out_specs=pl.BlockSpec((tb, out_dim), lambda i: (i, 0)),
        )
        return pl.pallas_call(
            _mlp_heads_kernel,
            out_shape=jax.ShapeDtypeStruct((B, out_dim), jnp.float32),
            grid_spec=grid_spec,
            compiler_params=pltpu.CompilerParams(
                dimension_semantics=sem, vmem_limit_bytes=vmem_limit),
            cost_estimate=cost,
        )(features, w1, b1, w2bd, b2)

    if single_buffer_weights:
        try:
            return build_and_run(True)
        except Exception:
            # pipeline_mode=pl.Buffered(1) not supported by this JAX/Mosaic:
            # fall back to the default double-buffered resident weights.
            pass
    return build_and_run(False)


# --------------------------------------------------------------------------
# Pure-JAX reference (mirror of the PyTorch per-head loop)
# --------------------------------------------------------------------------
def reference_forward(features, raw_params, *, matched=False):
    """matched=True mirrors the kernel's bf16 matmul inputs (f32 accum)."""
    w1_list, b1_list, w2_list, b2_list = raw_params
    outs = []
    for w1, b1, w2, b2 in zip(w1_list, b1_list, w2_list, b2_list):
        if matched:
            h = jnp.dot(features.astype(jnp.bfloat16), w1.astype(jnp.bfloat16),
                        preferred_element_type=jnp.float32)
            h = jnp.maximum(h + b1, 0.0)
            o = jnp.dot(h.astype(jnp.bfloat16), w2.astype(jnp.bfloat16),
                        preferred_element_type=jnp.float32) + b2
        else:
            h = jnp.maximum(features @ w1 + b1, 0.0)
            o = h @ w2 + b2
        outs.append(o[:, None])
    return jnp.concatenate(outs, axis=1)


if __name__ == "__main__":
    key = jax.random.PRNGKey(0)
    k_feat, k_param, k_feat2, k_param2 = jax.random.split(key, 4)

    # --- Primary check: out_dim=4 heads on a 128-row feature batch. ---------
    B, num_features, out_dim = 128, 32, 4
    features = jax.random.normal(k_feat, (B, num_features), jnp.float32)
    raw = init_params(k_param, num_features, out_dim)
    params = pack_params(raw, num_features, out_dim)

    out = jax.block_until_ready(mlp_layer_forward(features, params))
    assert out.shape == (B, out_dim)

    ref_m = reference_forward(features, raw, matched=True)
    assert jnp.allclose(out, ref_m, atol=2e-3, rtol=2e-3), \
        float(jnp.max(jnp.abs(out - ref_m)))
    ref_f = reference_forward(features, raw, matched=False)
    assert jnp.allclose(out, ref_f, atol=5e-2, rtol=5e-2), \
        float(jnp.max(jnp.abs(out - ref_f)))

    # --- Odd out_dim exercises the HF-padding (dummy zero head) path. -------
    B2, F2, od2 = 64, 32, 3
    feats2 = jax.random.normal(k_feat2, (B2, F2), jnp.float32)
    raw2 = init_params(k_param2, F2, od2)
    params2 = pack_params(raw2, F2, od2)
    out2 = jax.block_until_ready(mlp_layer_forward(feats2, params2))
    assert out2.shape == (B2, od2)
    ref2 = reference_forward(feats2, raw2, matched=True)
    assert jnp.allclose(out2, ref2, atol=2e-3, rtol=2e-3), \
        float(jnp.max(jnp.abs(out2 - ref2)))

    print("KERNEL_OK")
</pallas_src>

<mosaic_0001>
module attributes {stable_mosaic.version = 11 : i64} {
  func.func @_mlp_heads_kernel(%arg0: i32, %arg1: memref<128x32xf32, #tpu.memory_space<vmem>>, %arg2: memref<32x256xbf16, #tpu.memory_space<vmem>>, %arg3: memref<1x256xf32, #tpu.memory_space<vmem>>, %arg4: memref<256x128xbf16, #tpu.memory_space<vmem>>, %arg5: memref<1x128xf32, #tpu.memory_space<vmem>>, %arg6: memref<128x4xf32, #tpu.memory_space<vmem>>) attributes {dimension_semantics = [#tpu.dimension_semantics<parallel>], iteration_bounds = array<i64: 1>, scalar_prefetch = 0 : i64, scratch_operands = 0 : i64, tpu.core_type = #tpu.core_type<tc>, window_params = [{transform_indices = @transform_0, window_bounds = array<i64: 128, 32>}, {pipeline_mode = #tpu.pipeline_mode<synchronous>, transform_indices = @transform_1, window_bounds = array<i64: 32, 256>}, {pipeline_mode = #tpu.pipeline_mode<synchronous>, transform_indices = @transform_2, window_bounds = array<i64: 1, 256>}, {pipeline_mode = #tpu.pipeline_mode<synchronous>, transform_indices = @transform_3, window_bounds = array<i64: 256, 128>}, {pipeline_mode = #tpu.pipeline_mode<synchronous>, transform_indices = @transform_4, window_bounds = array<i64: 1, 128>}, {transform_indices = @transform_5, window_bounds = array<i64: 128, 4>}]} {
    %c0 = arith.constant 0 : index
    %c0_0 = arith.constant 0 : index
    %0 = vector.load %arg1[%c0, %c0_0] : memref<128x32xf32, #tpu.memory_space<vmem>>, vector<128x32xf32>
    %1 = arith.truncf %0 : vector<128x32xf32> to vector<128x32xbf16>
    %c0_1 = arith.constant 0 : index
    %c0_2 = arith.constant 0 : index
    %2 = vector.load %arg2[%c0_1, %c0_2] : memref<32x256xbf16, #tpu.memory_space<vmem>>, vector<32x256xbf16>
    %cst = arith.constant dense<0.000000e+00> : vector<128x256xf32>
    %3 = tpu.matmul %1, %2, %cst {dimension_numbers = #tpu.dot_dimension_numbers<[1], [0], [0], [1], [0, 0, 1, 1], [], []>} : vector<128x32xbf16>, vector<32x256xbf16>, vector<128x256xf32> -> vector<128x256xf32>
    %c0_3 = arith.constant 0 : index
    %c0_4 = arith.constant 0 : index
    %4 = vector.load %arg3[%c0_3, %c0_4] : memref<1x256xf32, #tpu.memory_space<vmem>>, vector<1x256xf32>
    %5 = vector.broadcast %4 : vector<1x256xf32> to vector<128x256xf32>
    %6 = arith.addf %3, %5 : vector<128x256xf32>
    %cst_5 = arith.constant 0.000000e+00 : f32
    %7 = vector.broadcast %cst_5 : f32 to vector<128x256xf32>
    %8 = arith.maximumf %6, %7 : vector<128x256xf32>
    %9 = arith.truncf %8 : vector<128x256xf32> to vector<128x256xbf16>
    %c0_6 = arith.constant 0 : index
    %c0_7 = arith.constant 0 : index
    %10 = vector.load %arg4[%c0_6, %c0_7] : memref<256x128xbf16, #tpu.memory_space<vmem>>, vector<256x128xbf16>
    %cst_8 = arith.constant dense<0.000000e+00> : vector<128x128xf32>
    %11 = tpu.matmul %9, %10, %cst_8 {dimension_numbers = #tpu.dot_dimension_numbers<[1], [0], [0], [1], [0, 0, 1, 1], [], []>} : vector<128x256xbf16>, vector<256x128xbf16>, vector<128x128xf32> -> vector<128x128xf32>
    %c0_9 = arith.constant 0 : index
    %c0_10 = arith.constant 0 : index
    %12 = vector.load %arg5[%c0_9, %c0_10] : memref<1x128xf32, #tpu.memory_space<vmem>>, vector<1x128xf32>
    %13 = vector.broadcast %12 : vector<1x128xf32> to vector<128x128xf32>
    %14 = arith.addf %11, %13 : vector<128x128xf32>
    %15 = vector.extract_strided_slice %14 {offsets = [0, 0], sizes = [128, 4], strides = [1, 1]} : vector<128x128xf32> to vector<128x4xf32>
    %c0_11 = arith.constant 0 : index
    %c0_12 = arith.constant 0 : index
    %16 = vector.load %arg6[%c0_11, %c0_12] : memref<128x4xf32, #tpu.memory_space<vmem>>, vector<128x4xf32>
    tpu.vector_store %arg6[%c0_11, %c0_12], %15 {strides = array<i32>} : memref<128x4xf32, #tpu.memory_space<vmem>>, vector<128x4xf32>,
    return
  }
  func.func @transform_0(%arg0: i32) -> (i32, i32) {
    %c0_i32 = arith.constant 0 : i32
    %c0_i32_0 = arith.constant 0 : i32
    return %arg0, %c0_i32 : i32, i32
  }
  func.func @transform_1(%arg0: i32) -> (i32, i32) {
    %c0_i32 = arith.constant 0 : i32
    %c0_i32_0 = arith.constant 0 : i32
    %c0_i32_1 = arith.constant 0 : i32
    return %c0_i32, %c0_i32_0 : i32, i32
  }
  func.func @transform_2(%arg0: i32) -> (i32, i32) {
    %c0_i32 = arith.constant 0 : i32
    %c0_i32_0 = arith.constant 0 : i32
    %c0_i32_1 = arith.constant 0 : i32
    return %c0_i32, %c0_i32_0 : i32, i32
  }
  func.func @transform_3(%arg0: i32) -> (i32, i32) {
    %c0_i32 = arith.constant 0 : i32
    %c0_i32_0 = arith.constant 0 : i32
    %c0_i32_1 = arith.constant 0 : i32
    return %c0_i32, %c0_i32_0 : i32, i32
  }
  func.func @transform_4(%arg0: i32) -> (i32, i32) {
    %c0_i32 = arith.constant 0 : i32
    %c0_i32_0 = arith.constant 0 : i32
    %c0_i32_1 = arith.constant 0 : i32
    return %c0_i32, %c0_i32_0 : i32, i32
  }
  func.func @transform_5(%arg0: i32) -> (i32, i32) {
    %c0_i32 = arith.constant 0 : i32
    %c0_i32_0 = arith.constant 0 : i32
    return %arg0, %c0_i32 : i32, i32
  }
}

module attributes {stable_mosaic.version = 11 : i64} {
  func.func @_mlp_heads_kernel(%arg0: i32, %arg1: memref<128x32xf32, #tpu.memory_space<vmem>>, %arg2: memref<32x256xbf16, #tpu.memory_space<vmem>>, %arg3: memref<1x256xf32, #tpu.memory_space<vmem>>, %arg4: memref<256x128xbf16, #tpu.memory_space<vmem>>, %arg5: memref<1x128xf32, #tpu.memory_space<vmem>>, %arg6: memref<128x4xf32, #tpu.memory_space<vmem>>) attributes {dimension_semantics = [#tpu.dimension_semantics<parallel>], iteration_bounds = array<i64: 1>, scalar_prefetch = 0 : i64, scratch_operands = 0 : i64, tpu.core_type = #tpu.core_type<tc>, window_params = [{transform_indices = @transform_0, window_bounds = array<i64: 128, 32>}, {pipeline_mode = #tpu.pipeline_mode<synchronous>, transform_indices = @transform_1, window_bounds = array<i64: 32, 256>}, {pipeline_mode = #tpu.pipeline_mode<synchronous>, transform_indices = @transform_2, window_bounds = array<i64: 1, 256>}, {pipeline_mode = #tpu.pipeline_mode<synchronous>, transform_indices = @transform_3, window_bounds = array<i64: 256, 128>}, {pipeline_mode = #tpu.pipeline_mode<synchronous>, transform_indices = @transform_4, window_bounds = array<i64: 1, 128>}, {transform_indices = @transform_5, window_bounds = array<i64: 128, 4>}]} {
    %c0 = arith.constant 0 : index
    %c0_0 = arith.constant 0 : index
    %0 = vector.load %arg1[%c0, %c0_0] : memref<128x32xf32, #tpu.memory_space<vmem>>, vector<128x32xf32>
    %1 = arith.truncf %0 : vector<128x32xf32> to vector<128x32xbf16>
    %c0_1 = arith.constant 0 : index
    %c0_2 = arith.constant 0 : index
    %2 = vector.load %arg2[%c0_1, %c0_2] : memref<32x256xbf16, #tpu.memory_space<vmem>>, vector<32x256xbf16>
    %cst = arith.constant dense<0.000000e+00> : vector<128x256xf32>
    %3 = tpu.matmul %1, %2, %cst {dimension_numbers = #tpu.dot_dimension_numbers<[1], [0], [0], [1], [0, 0, 1, 1], [], []>} : vector<128x32xbf16>, vector<32x256xbf16>, vector<128x256xf32> -> vector<128x256xf32>
    %c0_3 = arith.constant 0 : index
    %c0_4 = arith.constant 0 : index
    %4 = vector.load %arg3[%c0_3, %c0_4] : memref<1x256xf32, #tpu.memory_space<vmem>>, vector<1x256xf32>
    %5 = vector.broadcast %4 : vector<1x256xf32> to vector<128x256xf32>
    %6 = arith.addf %3, %5 : vector<128x256xf32>
    %cst_5 = arith.constant 0.000000e+00 : f32
    %7 = vector.broadcast %cst_5 : f32 to vector<128x256xf32>
    %8 = arith.maximumf %6, %7 : vector<128x256xf32>
    %9 = arith.truncf %8 : vector<128x256xf32> to vector<128x256xbf16>
    %c0_6 = arith.constant 0 : index
    %c0_7 = arith.constant 0 : index
    %10 = vector.load %arg4[%c0_6, %c0_7] : memref<256x128xbf16, #tpu.memory_space<vmem>>, vector<256x128xbf16>
    %cst_8 = arith.constant dense<0.000000e+00> : vector<128x128xf32>
    %11 = tpu.matmul %9, %10, %cst_8 {dimension_numbers = #tpu.dot_dimension_numbers<[1], [0], [0], [1], [0, 0, 1, 1], [], []>} : vector<128x256xbf16>, vector<256x128xbf16>, vector<128x128xf32> -> vector<128x128xf32>
    %c0_9 = arith.constant 0 : index
    %c0_10 = arith.constant 0 : index
    %12 = vector.load %arg5[%c0_9, %c0_10] : memref<1x128xf32, #tpu.memory_space<vmem>>, vector<1x128xf32>
    %13 = vector.broadcast %12 : vector<1x128xf32> to vector<128x128xf32>
    %14 = arith.addf %11, %13 : vector<128x128xf32>
    %15 = vector.extract_strided_slice %14 {offsets = [0, 0], sizes = [128, 4], strides = [1, 1]} : vector<128x128xf32> to vector<128x4xf32>
    %c0_11 = arith.constant 0 : index
    %c0_12 = arith.constant 0 : index
    %16 = vector.load %arg6[%c0_11, %c0_12] : memref<128x4xf32, #tpu.memory_space<vmem>>, vector<128x4xf32>
    tpu.vector_store %arg6[%c0_11, %c0_12], %15 {strides = array<i32>} : memref<128x4xf32, #tpu.memory_space<vmem>>, vector<128x4xf32>,
    return
  }
  func.func @transform_0(%arg0: i32) -> (i32, i32) {
    %c0_i32 = arith.constant 0 : i32
    %c0_i32_0 = arith.constant 0 : i32
    return %arg0, %c0_i32 : i32, i32
  }
  func.func @transform_1(%arg0: i32) -> (i32, i32) {
    %c0_i32 = arith.constant 0 : i32
    %c0_i32_0 = arith.constant 0 : i32
    %c0_i32_1 = arith.constant 0 : i32
    return %c0_i32, %c0_i32_0 : i32, i32
  }
  func.func @transform_2(%arg0: i32) -> (i32, i32) {
    %c0_i32 = arith.constant 0 : i32
    %c0_i32_0 = arith.constant 0 : i32
    %c0_i32_1 = arith.constant 0 : i32
    return %c0_i32, %c0_i32_0 : i32, i32
  }
  func.func @transform_3(%arg0: i32) -> (i32, i32) {
    %c0_i32 = arith.constant 0 : i32
    %c0_i32_0 = arith.constant 0 : i32
    %c0_i32_1 = arith.constant 0 : i32
    return %c0_i32, %c0_i32_0 : i32, i32
  }
  func.func @transform_4(%arg0: i32) -> (i32, i32) {
    %c0_i32 = arith.constant 0 : i32
    %c0_i32_0 = arith.constant 0 : i32
    %c0_i32_1 = arith.constant 0 : i32
    return %c0_i32, %c0_i32_0 : i32, i32
  }
  func.func @transform_5(%arg0: i32) -> (i32, i32) {
    %c0_i32 = arith.constant 0 : i32
    %c0_i32_0 = arith.constant 0 : i32
    return %arg0, %c0_i32 : i32, i32
  }
}

</mosaic_0001>

<llo_original>
// kernel: tpu_custom_call.1
$region0: #{tpu_custom_call.1}
  #allocation0 [shape = 'u32[]', space=smem, size = 0x4, offset = 0x4, fixed_abs, tag = 'smem constant byte address 0x4 - core index']
  #allocation1 [shape = 'u32[144,128]{1,0:T(1,128)}', space=vmem, size = 0x12000, scoped, tag = 'internal scratch']
  %s0 = inlined_call_operand.vmem [shape: f32[128,32], index: 0, kind: input, shape index: {}]
  %s1 = inlined_call_operand.vmem [shape: bf16[32,256], index: 1, kind: input, shape index: {}]
  %s2 = inlined_call_operand.vmem [shape: f32[1,256], index: 2, kind: input, shape index: {}]
  %s3 = inlined_call_operand.vmem [shape: bf16[256,128], index: 3, kind: input, shape index: {}]
  %s4 = inlined_call_operand.vmem [shape: f32[1,128], index: 4, kind: input, shape index: {}]
  %s5 = inlined_call_operand.vmem [shape: f32[128,4], index: 5, kind: output, shape index: {}]
  %s6 = sld [smem:[#allocation0]]
  $region30: #{tpu_custom_call.1} parent=0
    _
  %s8 = ssub.s32 1, %s6
  %s9 = scalar_select 0, %s8, %s6
  // Predicated region
  $region2: #{tpu_custom_call.1} parent=0 // pred_check
    _
  $region3: #{tpu_custom_call.1} parent=0 // pred_check_branch
    %11 = sbr.rel (0) target = $region5
  $region4: #{tpu_custom_call.1} parent=0 // pred_region
    _
  $region5: #{tpu_custom_call.1} parent=0 // pred_fallthru
    _
  // Predicated region
  $region6: #{tpu_custom_call.1} parent=0 // pred_check
    _
  $region7: #{tpu_custom_call.1} parent=0 // pred_check_branch
    %13 = sbr.rel (0) target = $region9
  $region8: #{tpu_custom_call.1} parent=0 // pred_region
    _
  $region9: #{tpu_custom_call.1} parent=0 // pred_fallthru
    _
  // Predicated region
  $region10: #{tpu_custom_call.1} parent=0 // pred_check
    _
  $region11: #{tpu_custom_call.1} parent=0 // pred_check_branch
    %15 = sbr.rel (0) target = $region13
  $region12: #{tpu_custom_call.1} parent=0 // pred_region
    _
  $region13: #{tpu_custom_call.1} parent=0 // pred_fallthru
    _
  // Predicated region
  $region14: #{tpu_custom_call.1} parent=0 // pred_check
    _
  $region15: #{tpu_custom_call.1} parent=0 // pred_check_branch
    %17 = sbr.rel (0) target = $region17
  $region16: #{tpu_custom_call.1} parent=0 // pred_region
    _
  $region17: #{tpu_custom_call.1} parent=0 // pred_fallthru
    _
  // Predicated region
  $region18: #{tpu_custom_call.1} parent=0 // pred_check
    _
  $region19: #{tpu_custom_call.1} parent=0 // pred_check_branch
    %19 = sbr.rel (0) target = $region21
  $region20: #{tpu_custom_call.1} parent=0 // pred_region
    _
  $region21: #{tpu_custom_call.1} parent=0 // pred_fallthru
    _
  %v21 = vld [vmem:[%s0] sm:$0xff]
  %v22 = vld [vmem:[%s0 + $0x8] sm:$0xff]
  %v23 = vld [vmem:[%s0 + $0x10] sm:$0xff]
  %v24 = vld [vmem:[%s0 + $0x18] sm:$0xff]
  %v25 = vld [vmem:[%s0 + $0x20] sm:$0xff]
  %v26 = vld [vmem:[%s0 + $0x28] sm:$0xff]
  %v27 = vld [vmem:[%s0 + $0x30] sm:$0xff]
  %v28 = vld [vmem:[%s0 + $0x38] sm:$0xff]
  %v29 = vld [vmem:[%s0 + $0x40] sm:$0xff]
  %v30 = vld [vmem:[%s0 + $0x48] sm:$0xff]
  %v31 = vld [vmem:[%s0 + $0x50] sm:$0xff]
  %v32 = vld [vmem:[%s0 + $0x58] sm:$0xff]
  %v33 = vld [vmem:[%s0 + $0x60] sm:$0xff]
  %v34 = vld [vmem:[%s0 + $0x68] sm:$0xff]
  %v35 = vld [vmem:[%s0 + $0x70] sm:$0xff]
  %v36 = vld [vmem:[%s0 + $0x78] sm:$0xff]
  %v37 = vpack.c.bf16 %v22, %v21
  %v38 = vpack.c.bf16 %v24, %v23
  %v39 = vpack.c.bf16 %v26, %v25
  %v40 = vpack.c.bf16 %v28, %v27
  %v41 = vpack.c.bf16 %v30, %v29
  %v42 = vpack.c.bf16 %v32, %v31
  %v43 = vpack.c.bf16 %v34, %v33
  %v44 = vpack.c.bf16 %v36, %v35
  %v45 = vld [vmem:[%s1] sm:$0xff]
  %v46 = vld [vmem:[%s1 + $0x8] sm:$0xff]
  %v47 = vld [vmem:[%s1 + $0x10] sm:$0xff]
  %v48 = vld [vmem:[%s1 + $0x18] sm:$0xff]
  %v49 = vld [vmem:[%s2] sm:$0x3]
  %v51 = vlaneseq
  %v52 = vshrl.u32 %v51, 7
  %v53 = vsub.s32 0, %v52
  %v54 = vrot.slane %v49, %v53
  %v55 = vlaneseq
  %v56 = vshrl.u32 %v55, 7
  %v57 = vsub.s32 1, %v56
  %v58 = vrot.slane %v49, %v57
  %v65 = vunpack.c.l.b16 %v45
  %v66 = vunpack.c.h.b16 %v45
  %v67 = vunpack.c.l.b16 %v46
  %v68 = vunpack.c.h.b16 %v46
  %v69 = vunpack.c.l.b16 %v47
  %v70 = vunpack.c.h.b16 %v47
  %v71 = vunpack.c.l.b16 %v48
  %v72 = vunpack.c.h.b16 %v48
  %v73 = vpack.c.b16 %v67, %v65
  %v74 = vpack.c.b16 %v68, %v66
  %v75 = vpack.c.b16 %v71, %v69
  %v76 = vpack.c.b16 %v72, %v70
  %vm81 = vcmask 261120
  %v83 = vsel %vm81, %v37, 0
  %v86 = vsel %vm81, %v38, 0
  %v89 = vsel %vm81, %v39, 0
  %v92 = vsel %vm81, %v40, 0
  %v95 = vsel %vm81, %v41, 0
  %v98 = vsel %vm81, %v42, 0
  %v101 = vsel %vm81, %v43, 0
  %v104 = vsel %vm81, %v44, 0
  %106 = vmatprep.subr.bf16.mxu0 %v74
  %107 = vmatpush1.bf16.msra.mxu0 %v73
  %108 = vmatprep.subr.bf16.mxu0 %v76
  %109 = vmatpush1.bf16.msra.mxu0 %v75
  %110 = vmatprep.subr.bf16.mxu0 0
  %111 = vmatpush1.bf16.msra.mxu0 0
  %112 = vmatprep.subr.bf16.mxu0 0
  %113 = vmatpush1.bf16.msra.mxu0 0
  %114 = vmatprep.subr.bf16.mxu0 0
  %115 = vmatpush1.bf16.msra.mxu0 0
  %116 = vmatprep.subr.bf16.mxu0 0
  %117 = vmatpush1.bf16.msra.mxu0 0
  %118 = vmatprep.subr.bf16.mxu0 0
  %119 = vmatpush1.bf16.msra.mxu0 0
  %120 = vmatprep.subr.bf16.mxu0 0
  %121 = vmatpush1.bf16.msra.mxu0 0
  %122 = vmatprep.subr.bf16.mxu0 0
  %123 = vmatpush1.bf16.msra.mxu0 0
  %124 = vmatprep.subr.bf16.mxu0 0
  %125 = vmatpush1.bf16.msra.mxu0 0
  %126 = vmatprep.subr.bf16.mxu0 0
  %127 = vmatpush1.bf16.msra.mxu0 0
  %128 = vmatprep.subr.bf16.mxu0 0
  %129 = vmatpush1.bf16.msra.mxu0 0
  %130 = vmatprep.subr.bf16.mxu0 0
  %131 = vmatpush1.bf16.msra.mxu0 0
  %132 = vmatprep.subr.bf16.mxu0 0
  %133 = vmatpush1.bf16.msra.mxu0 0
  %134 = vmatprep.subr.bf16.mxu0 0
  %135 = vmatpush1.bf16.msra.mxu0 0
  %136 = vmatprep.subr.bf16.mxu0 0
  %137 = vmatpush1.bf16.msra.mxu0 0
  %138 = vmatprep.mubr.bf16.mxu0 0
  %139 = vmatmul.mubr.bf16.gmra.mrb[0].mxu0 %v83
  %v140 = vpop.f32.mrb[0].mxu0
  %v141 = vadd.f32 %v54, %v140
  %v142 = vpop.f32.mrb[0].mxu0
  %v143 = vadd.f32 %v58, %v142
  %v144 = vpop.f32.mrb[0].mxu0
  %v145 = vadd.f32 %v54, %v144
  %v146 = vpop.f32.mrb[0].mxu0
  %v147 = vadd.f32 %v58, %v146
  %148 = vmatprep.mubr.bf16.mxu0 0
  %149 = vmatmul.mubr.bf16.gmra.mrb[0].mxu0 %v86
  %v150 = vpop.f32.mrb[0].mxu0
  %v151 = vadd.f32 %v54, %v150
  %v152 = vpop.f32.mrb[0].mxu0
  %v153 = vadd.f32 %v58, %v152
  %v154 = vpop.f32.mrb[0].mxu0
  %v155 = vadd.f32 %v54, %v154
  %v156 = vpop.f32.mrb[0].mxu0
  %v157 = vadd.f32 %v58, %v156
  %158 = vmatprep.mubr.bf16.mxu0 0
  %159 = vmatmul.mubr.bf16.gmra.mrb[0].mxu0 %v89
  %v160 = vpop.f32.mrb[0].mxu0
  %v161 = vadd.f32 %v54, %v160
  %v162 = vpop.f32.mrb[0].mxu0
  %v163 = vadd.f32 %v58, %v162
  %v164 = vpop.f32.mrb[0].mxu0
  %v165 = vadd.f32 %v54, %v164
  %v166 = vpop.f32.mrb[0].mxu0
  %v167 = vadd.f32 %v58, %v166
  %168 = vmatprep.mubr.bf16.mxu0 0
  %169 = vmatmul.mubr.bf16.gmra.mrb[0].mxu0 %v92
  %v170 = vpop.f32.mrb[0].mxu0
  %v171 = vadd.f32 %v54, %v170
  %v172 = vpop.f32.mrb[0].mxu0
  %v173 = vadd.f32 %v58, %v172
  %v174 = vpop.f32.mrb[0].mxu0
  %v175 = vadd.f32 %v54, %v174
  %v176 = vpop.f32.mrb[0].mxu0
  %v177 = vadd.f32 %v58, %v176
  %178 = vmatprep.mubr.bf16.mxu0 0
  %179 = vmatmul.mubr.bf16.gmra.mrb[0].mxu0 %v95
  %v180 = vpop.f32.mrb[0].mxu0
  %v181 = vadd.f32 %v54, %v180
  %v182 = vpop.f32.mrb[0].mxu0
  %v183 = vadd.f32 %v58, %v182
  %v184 = vpop.f32.mrb[0].mxu0
  %v185 = vadd.f32 %v54, %v184
  %v186 = vpop.f32.mrb[0].mxu0
  %v187 = vadd.f32 %v58, %v186
  %188 = vmatprep.mubr.bf16.mxu0 0
  %189 = vmatmul.mubr.bf16.gmra.mrb[0].mxu0 %v98
  %v190 = vpop.f32.mrb[0].mxu0
  %v191 = vadd.f32 %v54, %v190
  %v192 = vpop.f32.mrb[0].mxu0
  %v193 = vadd.f32 %v58, %v192
  %v194 = vpop.f32.mrb[0].mxu0
  %v195 = vadd.f32 %v54, %v194
  %v196 = vpop.f32.mrb[0].mxu0
  %v197 = vadd.f32 %v58, %v196
  %198 = vmatprep.mubr.bf16.mxu0 0
  %199 = vmatmul.mubr.bf16.gmra.mrb[0].mxu0 %v101
  %v200 = vpop.f32.mrb[0].mxu0
  %v201 = vadd.f32 %v54, %v200
  %v202 = vpop.f32.mrb[0].mxu0
  %v203 = vadd.f32 %v58, %v202
  %v204 = vpop.f32.mrb[0].mxu0
  %v205 = vadd.f32 %v54, %v204
  %v206 = vpop.f32.mrb[0].mxu0
  %v207 = vadd.f32 %v58, %v206
  %208 = vmatprep.mubr.bf16.mxu0 0
  %209 = vmatmul.mubr.bf16.gmra.mrb[0].mxu0 %v104
  %v210 = vpop.f32.mrb[0].mxu0
  %v211 = vadd.f32 %v54, %v210
  %v212 = vpop.f32.mrb[0].mxu0
  %v213 = vadd.f32 %v58, %v212
  %v214 = vpop.f32.mrb[0].mxu0
  %v215 = vadd.f32 %v54, %v214
  %v216 = vpop.f32.mrb[0].mxu0
  %v217 = vadd.f32 %v58, %v216
  %218 = vdwg.mxu0
  %v219 = vmax.f32 %v141, 0.0
  %v220 = vmax.f32 %v143, 0.0
  %v221 = vmax.f32 %v145, 0.0
  %v222 = vmax.f32 %v147, 0.0
  %v223 = vmax.f32 %v151, 0.0
  %v224 = vmax.f32 %v153, 0.0
  %v225 = vmax.f32 %v155, 0.0
  %v226 = vmax.f32 %v157, 0.0
  %v227 = vmax.f32 %v161, 0.0
  %v228 = vmax.f32 %v163, 0.0
  %v229 = vmax.f32 %v165, 0.0
  %v230 = vmax.f32 %v167, 0.0
  %v231 = vmax.f32 %v171, 0.0
  %v232 = vmax.f32 %v173, 0.0
  %v233 = vmax.f32 %v175, 0.0
  %v234 = vmax.f32 %v177, 0.0
  %v235 = vmax.f32 %v181, 0.0
  %v236 = vmax.f32 %v183, 0.0
  %v237 = vmax.f32 %v185, 0.0
  %v238 = vmax.f32 %v187, 0.0
  %v239 = vmax.f32 %v191, 0.0
  %v240 = vmax.f32 %v193, 0.0
  %v241 = vmax.f32 %v195, 0.0
  %v242 = vmax.f32 %v197, 0.0
  %v243 = vmax.f32 %v201, 0.0
  %v244 = vmax.f32 %v203, 0.0
  %v245 = vmax.f32 %v205, 0.0
  %v246 = vmax.f32 %v207, 0.0
  %v247 = vmax.f32 %v211, 0.0
  %v248 = vmax.f32 %v213, 0.0
  %v249 = vmax.f32 %v215, 0.0
  %v250 = vmax.f32 %v217, 0.0
  %v251 = vpack.c.bf16 %v221, %v219
  %v252 = vpack.c.bf16 %v222, %v220
  %v253 = vpack.c.bf16 %v225, %v223
  %v254 = vpack.c.bf16 %v226, %v224
  %v255 = vpack.c.bf16 %v229, %v227
  %v256 = vpack.c.bf16 %v230, %v228
  %v257 = vpack.c.bf16 %v233, %v231
  %v258 = vpack.c.bf16 %v234, %v232
  %v259 = vpack.c.bf16 %v237, %v235
  %v260 = vpack.c.bf16 %v238, %v236
  %v261 = vpack.c.bf16 %v241, %v239
  %v262 = vpack.c.bf16 %v242, %v240
  %v263 = vpack.c.bf16 %v245, %v243
  %v264 = vpack.c.bf16 %v246, %v244
  %v265 = vpack.c.bf16 %v249, %v247
  %v266 = vpack.c.bf16 %v250, %v248
  %v267 = vld [vmem:[%s3] sm:$0xf]
  %v268 = vld [vmem:[%s3 + $0x4] sm:$0xf]
  %v269 = vld [vmem:[%s3 + $0x8] sm:$0xf]
  %v270 = vld [vmem:[%s3 + $0xc] sm:$0xf]
  %v271 = vld [vmem:[%s3 + $0x10] sm:$0xf]
  %v272 = vld [vmem:[%s3 + $0x14] sm:$0xf]
  %v273 = vld [vmem:[%s3 + $0x18] sm:$0xf]
  %v274 = vld [vmem:[%s3 + $0x1c] sm:$0xf]
  %v275 = vld [vmem:[%s3 + $0x20] sm:$0xf]
  %v276 = vld [vmem:[%s3 + $0x24] sm:$0xf]
  %v277 = vld [vmem:[%s3 + $0x28] sm:$0xf]
  %v278 = vld [vmem:[%s3 + $0x2c] sm:$0xf]
  %v279 = vld [vmem:[%s3 + $0x30] sm:$0xf]
  %v280 = vld [vmem:[%s3 + $0x34] sm:$0xf]
  %v281 = vld [vmem:[%s3 + $0x38] sm:$0xf]
  %v282 = vld [vmem:[%s3 + $0x3c] sm:$0xf]
  %v283 = vld [vmem:[%s3 + $0x40] sm:$0xf]
  %v284 = vld [vmem:[%s3 + $0x44] sm:$0xf]
  %v285 = vld [vmem:[%s3 + $0x48] sm:$0xf]
  %v286 = vld [vmem:[%s3 + $0x4c] sm:$0xf]
  %v287 = vld [vmem:[%s3 + $0x50] sm:$0xf]
  %v288 = vld [vmem:[%s3 + $0x54] sm:$0xf]
  %v289 = vld [vmem:[%s3 + $0x58] sm:$0xf]
  %v290 = vld [vmem:[%s3 + $0x5c] sm:$0xf]
  %v291 = vld [vmem:[%s3 + $0x60] sm:$0xf]
  %v292 = vld [vmem:[%s3 + $0x64] sm:$0xf]
  %v293 = vld [vmem:[%s3 + $0x68] sm:$0xf]
  %v294 = vld [vmem:[%s3 + $0x6c] sm:$0xf]
  %v295 = vld [vmem:[%s3 + $0x70] sm:$0xf]
  %v296 = vld [vmem:[%s3 + $0x74] sm:$0xf]
  %v297 = vld [vmem:[%s3 + $0x78] sm:$0xf]
  %v298 = vld [vmem:[%s3 + $0x7c] sm:$0xf]
  %v299 = vld [vmem:[%s4] sm:$0x1]
  %v301 = vlaneseq
  %v302 = vshrl.u32 %v301, 7
  %v303 = vsub.s32 0, %v302
  %v304 = vrot.slane %v299, %v303
  %v338 = vunpack.c.l.b16 %v267
  %v339 = vunpack.c.l.b16 %v268
  %v340 = vunpack.c.l.b16 %v269
  %v341 = vunpack.c.l.b16 %v270
  %v342 = vunpack.c.l.b16 %v271
  %v343 = vunpack.c.l.b16 %v272
  %v344 = vunpack.c.l.b16 %v273
  %v345 = vunpack.c.l.b16 %v274
  %v346 = vunpack.c.l.b16 %v275
  %v347 = vunpack.c.l.b16 %v276
  %v348 = vunpack.c.l.b16 %v277
  %v349 = vunpack.c.l.b16 %v278
  %v350 = vunpack.c.l.b16 %v279
  %v351 = vunpack.c.l.b16 %v280
  %v352 = vunpack.c.l.b16 %v281
  %v353 = vunpack.c.l.b16 %v282
  %v354 = vunpack.c.l.b16 %v283
  %v355 = vunpack.c.l.b16 %v284
  %v356 = vunpack.c.l.b16 %v285
  %v357 = vunpack.c.l.b16 %v286
  %v358 = vunpack.c.l.b16 %v287
  %v359 = vunpack.c.l.b16 %v288
  %v360 = vunpack.c.l.b16 %v289
  %v361 = vunpack.c.l.b16 %v290
  %v362 = vunpack.c.l.b16 %v291
  %v363 = vunpack.c.l.b16 %v292
  %v364 = vunpack.c.l.b16 %v293
  %v365 = vunpack.c.l.b16 %v294
  %v366 = vunpack.c.l.b16 %v295
  %v367 = vunpack.c.l.b16 %v296
  %v368 = vunpack.c.l.b16 %v297
  %v369 = vunpack.c.l.b16 %v298
  %v370 = vpack.c.b16 %v339, %v338
  %v371 = vpack.c.b16 %v341, %v340
  %v372 = vpack.c.b16 %v343, %v342
  %v373 = vpack.c.b16 %v345, %v344
  %v374 = vpack.c.b16 %v347, %v346
  %v375 = vpack.c.b16 %v349, %v348
  %v376 = vpack.c.b16 %v351, %v350
  %v377 = vpack.c.b16 %v353, %v352
  %v378 = vpack.c.b16 %v355, %v354
  %v379 = vpack.c.b16 %v357, %v356
  %v380 = vpack.c.b16 %v359, %v358
  %v381 = vpack.c.b16 %v361, %v360
  %v382 = vpack.c.b16 %v363, %v362
  %v383 = vpack.c.b16 %v365, %v364
  %v384 = vpack.c.b16 %v367, %v366
  %v385 = vpack.c.b16 %v369, %v368
  %402 = vmatprep.subr.bf16.mxu0 0
  %403 = vmatpush1.bf16.msra.mxu0 %v370
  %404 = vmatprep.subr.bf16.mxu0 0
  %405 = vmatpush1.bf16.msra.mxu0 %v371
  %406 = vmatprep.subr.bf16.mxu0 0
  %407 = vmatpush1.bf16.msra.mxu0 %v372
  %408 = vmatprep.subr.bf16.mxu0 0
  %409 = vmatpush1.bf16.msra.mxu0 %v373
  %410 = vmatprep.subr.bf16.mxu0 0
  %411 = vmatpush1.bf16.msra.mxu0 %v374
  %412 = vmatprep.subr.bf16.mxu0 0
  %413 = vmatpush1.bf16.msra.mxu0 %v375
  %414 = vmatprep.subr.bf16.mxu0 0
  %415 = vmatpush1.bf16.msra.mxu0 %v376
  %416 = vmatprep.subr.bf16.mxu0 0
  %417 = vmatpush1.bf16.msra.mxu0 %v377
  %418 = vmatprep.subr.bf16.mxu0 0
  %419 = vmatpush1.bf16.msra.mxu0 %v378
  %420 = vmatprep.subr.bf16.mxu0 0
  %421 = vmatpush1.bf16.msra.mxu0 %v379
  %422 = vmatprep.subr.bf16.mxu0 0
  %423 = vmatpush1.bf16.msra.mxu0 %v380
  %424 = vmatprep.subr.bf16.mxu0 0
  %425 = vmatpush1.bf16.msra.mxu0 %v381
  %426 = vmatprep.subr.bf16.mxu0 0
  %427 = vmatpush1.bf16.msra.mxu0 %v382
  %428 = vmatprep.subr.bf16.mxu0 0
  %429 = vmatpush1.bf16.msra.mxu0 %v383
  %430 = vmatprep.subr.bf16.mxu0 0
  %431 = vmatpush1.bf16.msra.mxu0 %v384
  %432 = vmatprep.subr.bf16.mxu0 0
  %433 = vmatpush1.bf16.msra.mxu0 %v385
  %434 = vmatprep.mubr.bf16.mxu0 %v252
  %435 = vmatmul.mubr.bf16.gmra.mrb[0].mxu0 %v251
  %v436 = vpop.f32.mrb[0].mxu0
  %v437 = vadd.f32 %v304, %v436
  %v438 = vpop.f32.mrb[0].mxu0
  %v439 = vpop.f32.mrb[0].mxu0
  %v440 = vadd.f32 %v304, %v439
  %v441 = vpop.f32.mrb[0].mxu0
  %442 = vmatprep.mubr.bf16.mxu0 %v254
  %443 = vmatmul.mubr.bf16.gmra.mrb[0].mxu0 %v253
  %v444 = vpop.f32.mrb[0].mxu0
  %v445 = vadd.f32 %v304, %v444
  %v446 = vpop.f32.mrb[0].mxu0
  %v447 = vpop.f32.mrb[0].mxu0
  %v448 = vadd.f32 %v304, %v447
  %v449 = vpop.f32.mrb[0].mxu0
  %450 = vmatprep.mubr.bf16.mxu0 %v256
  %451 = vmatmul.mubr.bf16.gmra.mrb[0].mxu0 %v255
  %v452 = vpop.f32.mrb[0].mxu0
  %v453 = vadd.f32 %v304, %v452
  %v454 = vpop.f32.mrb[0].mxu0
  %v455 = vpop.f32.mrb[0].mxu0
  %v456 = vadd.f32 %v304, %v455
  %v457 = vpop.f32.mrb[0].mxu0
  %458 = vmatprep.mubr.bf16.mxu0 %v258
  %459 = vmatmul.mubr.bf16.gmra.mrb[0].mxu0 %v257
  %v460 = vpop.f32.mrb[0].mxu0
  %v461 = vadd.f32 %v304, %v460
  %v462 = vpop.f32.mrb[0].mxu0
  %v463 = vpop.f32.mrb[0].mxu0
  %v464 = vadd.f32 %v304, %v463
  %v465 = vpop.f32.mrb[0].mxu0
  %466 = vmatprep.mubr.bf16.mxu0 %v260
  %467 = vmatmul.mubr.bf16.gmra.mrb[0].mxu0 %v259
  %v468 = vpop.f32.mrb[0].mxu0
  %v469 = vadd.f32 %v304, %v468
  %v470 = vpop.f32.mrb[0].mxu0
  %v471 = vpop.f32.mrb[0].mxu0
  %v472 = vadd.f32 %v304, %v471
  %v473 = vpop.f32.mrb[0].mxu0
  %474 = vmatprep.mubr.bf16.mxu0 %v262
  %475 = vmatmul.mubr.bf16.gmra.mrb[0].mxu0 %v261
  %v476 = vpop.f32.mrb[0].mxu0
  %v477 = vadd.f32 %v304, %v476
  %v478 = vpop.f32.mrb[0].mxu0
  %v479 = vpop.f32.mrb[0].mxu0
  %v480 = vadd.f32 %v304, %v479
  %v481 = vpop.f32.mrb[0].mxu0
  %482 = vmatprep.mubr.bf16.mxu0 %v264
  %483 = vmatmul.mubr.bf16.gmra.mrb[0].mxu0 %v263
  %v484 = vpop.f32.mrb[0].mxu0
  %v485 = vadd.f32 %v304, %v484
  %v486 = vpop.f32.mrb[0].mxu0
  %v487 = vpop.f32.mrb[0].mxu0
  %v488 = vadd.f32 %v304, %v487
  %v489 = vpop.f32.mrb[0].mxu0
  %490 = vmatprep.mubr.bf16.mxu0 %v266
  %491 = vmatmul.mubr.bf16.gmra.mrb[0].mxu0 %v265
  %v492 = vpop.f32.mrb[0].mxu0
  %v493 = vadd.f32 %v304, %v492
  %v494 = vpop.f32.mrb[0].mxu0
  %v495 = vpop.f32.mrb[0].mxu0
  %v496 = vadd.f32 %v304, %v495
  %v497 = vpop.f32.mrb[0].mxu0
  %498 = vdwg.mxu0
  %vm499 = vcmask 31744
  %500 = vst.msk [vmem:[%s5] sm:$0xff] %vm499, %v437
  %501 = vst.msk [vmem:[%s5 + $0x8] sm:$0xff] %vm499, %v440
  %502 = vst.msk [vmem:[%s5 + $0x10] sm:$0xff] %vm499, %v445
  %503 = vst.msk [vmem:[%s5 + $0x18] sm:$0xff] %vm499, %v448
  %504 = vst.msk [vmem:[%s5 + $0x20] sm:$0xff] %vm499, %v453
  %505 = vst.msk [vmem:[%s5 + $0x28] sm:$0xff] %vm499, %v456
  %506 = vst.msk [vmem:[%s5 + $0x30] sm:$0xff] %vm499, %v461
  %507 = vst.msk [vmem:[%s5 + $0x38] sm:$0xff] %vm499, %v464
  %508 = vst.msk [vmem:[%s5 + $0x40] sm:$0xff] %vm499, %v469
  %509 = vst.msk [vmem:[%s5 + $0x48] sm:$0xff] %vm499, %v472
  %510 = vst.msk [vmem:[%s5 + $0x50] sm:$0xff] %vm499, %v477
  %511 = vst.msk [vmem:[%s5 + $0x58] sm:$0xff] %vm499, %v480
  %512 = vst.msk [vmem:[%s5 + $0x60] sm:$0xff] %vm499, %v485
  %513 = vst.msk [vmem:[%s5 + $0x68] sm:$0xff] %vm499, %v488
  %514 = vst.msk [vmem:[%s5 + $0x70] sm:$0xff] %vm499, %v493
  %515 = vst.msk [vmem:[%s5 + $0x78] sm:$0xff] %vm499, %v496
  // Predicated region
  $region22: #{tpu_custom_call.1} parent=0 // pred_check
    _
  $region23: #{tpu_custom_call.1} parent=0 // pred_check_branch
    %517 = sbr.rel (0) target = $region25
  $region24: #{tpu_custom_call.1} parent=0 // pred_region
    _
  $region25: #{tpu_custom_call.1} parent=0 // pred_fallthru
    _
  // Predicated region
  $region26: #{tpu_custom_call.1} parent=0 // pred_check
    _
  $region27: #{tpu_custom_call.1} parent=0 // pred_check_branch
    %519 = sbr.rel (0) target = $region29
  $region28: #{tpu_custom_call.1} parent=0 // pred_region
    _
  $region29: #{tpu_custom_call.1} parent=0 // pred_fallthru
    _

// kernel: tpu_custom_call.1
$region0: #{tpu_custom_call.1}
  #allocation0 [shape = 'u32[]', space=smem, size = 0x4, offset = 0x4, fixed_abs, tag = 'smem constant byte address 0x4 - core index']
  #allocation1 [shape = 'u32[144,128]{1,0:T(1,128)}', space=vmem, size = 0x12000, scoped, tag = 'internal scratch']
  %s0 = inlined_call_operand.vmem [shape: f32[128,32], index: 0, kind: input, shape index: {}]
  %s1 = inlined_call_operand.vmem [shape: bf16[32,256], index: 1, kind: input, shape index: {}]
  %s2 = inlined_call_operand.vmem [shape: f32[1,256], index: 2, kind: input, shape index: {}]
  %s3 = inlined_call_operand.vmem [shape: bf16[256,128], index: 3, kind: input, shape index: {}]
  %s4 = inlined_call_operand.vmem [shape: f32[1,128], index: 4, kind: input, shape index: {}]
  %s5 = inlined_call_operand.vmem [shape: f32[128,4], index: 5, kind: output, shape index: {}]
  %s6 = sld [smem:[#allocation0]]
  $region30: #{tpu_custom_call.1} parent=0
    _
  %s8 = ssub.s32 1, %s6
  %s9 = scalar_select 0, %s8, %s6
  // Predicated region
  $region2: #{tpu_custom_call.1} parent=0 // pred_check
    _
  $region3: #{tpu_custom_call.1} parent=0 // pred_check_branch
    %11 = sbr.rel (0) target = $region5
  $region4: #{tpu_custom_call.1} parent=0 // pred_region
    _
  $region5: #{tpu_custom_call.1} parent=0 // pred_fallthru
    _
  // Predicated region
  $region6: #{tpu_custom_call.1} parent=0 // pred_check
    _
  $region7: #{tpu_custom_call.1} parent=0 // pred_check_branch
    %13 = sbr.rel (0) target = $region9
  $region8: #{tpu_custom_call.1} parent=0 // pred_region
    _
  $region9: #{tpu_custom_call.1} parent=0 // pred_fallthru
    _
  // Predicated region
  $region10: #{tpu_custom_call.1} parent=0 // pred_check
    _
  $region11: #{tpu_custom_call.1} parent=0 // pred_check_branch
    %15 = sbr.rel (0) target = $region13
  $region12: #{tpu_custom_call.1} parent=0 // pred_region
    _
  $region13: #{tpu_custom_call.1} parent=0 // pred_fallthru
    _
  // Predicated region
  $region14: #{tpu_custom_call.1} parent=0 // pred_check
    _
  $region15: #{tpu_custom_call.1} parent=0 // pred_check_branch
    %17 = sbr.rel (0) target = $region17
  $region16: #{tpu_custom_call.1} parent=0 // pred_region
    _
  $region17: #{tpu_custom_call.1} parent=0 // pred_fallthru
    _
  // Predicated region
  $region18: #{tpu_custom_call.1} parent=0 // pred_check
    _
  $region19: #{tpu_custom_call.1} parent=0 // pred_check_branch
    %19 = sbr.rel (0) target = $region21
  $region20: #{tpu_custom_call.1} parent=0 // pred_region
    _
  $region21: #{tpu_custom_call.1} parent=0 // pred_fallthru
    _
  %v21 = vld [vmem:[%s0] sm:$0xff]
  %v22 = vld [vmem:[%s0 + $0x8] sm:$0xff]
  %v23 = vld [vmem:[%s0 + $0x10] sm:$0xff]
  %v24 = vld [vmem:[%s0 + $0x18] sm:$0xff]
  %v25 = vld [vmem:[%s0 + $0x20] sm:$0xff]
  %v26 = vld [vmem:[%s0 + $0x28] sm:$0xff]
  %v27 = vld [vmem:[%s0 + $0x30] sm:$0xff]
  %v28 = vld [vmem:[%s0 + $0x38] sm:$0xff]
  %v29 = vld [vmem:[%s0 + $0x40] sm:$0xff]
  %v30 = vld [vmem:[%s0 + $0x48] sm:$0xff]
  %v31 = vld [vmem:[%s0 + $0x50] sm:$0xff]
  %v32 = vld [vmem:[%s0 + $0x58] sm:$0xff]
  %v33 = vld [vmem:[%s0 + $0x60] sm:$0xff]
  %v34 = vld [vmem:[%s0 + $0x68] sm:$0xff]
  %v35 = vld [vmem:[%s0 + $0x70] sm:$0xff]
  %v36 = vld [vmem:[%s0 + $0x78] sm:$0xff]
  %v37 = vpack.c.bf16 %v22, %v21
  %v38 = vpack.c.bf16 %v24, %v23
  %v39 = vpack.c.bf16 %v26, %v25
  %v40 = vpack.c.bf16 %v28, %v27
  %v41 = vpack.c.bf16 %v30, %v29
  %v42 = vpack.c.bf16 %v32, %v31
  %v43 = vpack.c.bf16 %v34, %v33
  %v44 = vpack.c.bf16 %v36, %v35
  %v45 = vld [vmem:[%s1] sm:$0xff]
  %v46 = vld [vmem:[%s1 + $0x8] sm:$0xff]
  %v47 = vld [vmem:[%s1 + $0x10] sm:$0xff]
  %v48 = vld [vmem:[%s1 + $0x18] sm:$0xff]
  %v49 = vld [vmem:[%s2] sm:$0x3]
  %v51 = vlaneseq
  %v52 = vshrl.u32 %v51, 7
  %v53 = vsub.s32 0, %v52
  %v54 = vrot.slane %v49, %v53
  %v55 = vlaneseq
  %v56 = vshrl.u32 %v55, 7
  %v57 = vsub.s32 1, %v56
  %v58 = vrot.slane %v49, %v57
  %v65 = vunpack.c.l.b16 %v45
  %v66 = vunpack.c.h.b16 %v45
  %v67 = vunpack.c.l.b16 %v46
  %v68 = vunpack.c.h.b16 %v46
  %v69 = vunpack.c.l.b16 %v47
  %v70 = vunpack.c.h.b16 %v47
  %v71 = vunpack.c.l.b16 %v48
  %v72 = vunpack.c.h.b16 %v48
  %v73 = vpack.c.b16 %v67, %v65
  %v74 = vpack.c.b16 %v68, %v66
  %v75 = vpack.c.b16 %v71, %v69
  %v76 = vpack.c.b16 %v72, %v70
  %vm81 = vcmask 261120
  %v83 = vsel %vm81, %v37, 0
  %v86 = vsel %vm81, %v38, 0
  %v89 = vsel %vm81, %v39, 0
  %v92 = vsel %vm81, %v40, 0
  %v95 = vsel %vm81, %v41, 0
  %v98 = vsel %vm81, %v42, 0
  %v101 = vsel %vm81, %v43, 0
  %v104 = vsel %vm81, %v44, 0
  %106 = vmatprep.subr.bf16.mxu0 %v74
  %107 = vmatpush1.bf16.msra.mxu0 %v73
  %108 = vmatprep.subr.bf16.mxu0 %v76
  %109 = vmatpush1.bf16.msra.mxu0 %v75
  %110 = vmatprep.subr.bf16.mxu0 0
  %111 = vmatpush1.bf16.msra.mxu0 0
  %112 = vmatprep.subr.bf16.mxu0 0
  %113 = vmatpush1.bf16.msra.mxu0 0
  %114 = vmatprep.subr.bf16.mxu0 0
  %115 = vmatpush1.bf16.msra.mxu0 0
  %116 = vmatprep.subr.bf16.mxu0 0
  %117 = vmatpush1.bf16.msra.mxu0 0
  %118 = vmatprep.subr.bf16.mxu0 0
  %119 = vmatpush1.bf16.msra.mxu0 0
  %120 = vmatprep.subr.bf16.mxu0 0
  %121 = vmatpush1.bf16.msra.mxu0 0
  %122 = vmatprep.subr.bf16.mxu0 0
  %123 = vmatpush1.bf16.msra.mxu0 0
  %124 = vmatprep.subr.bf16.mxu0 0
  %125 = vmatpush1.bf16.msra.mxu0 0
  %126 = vmatprep.subr.bf16.mxu0 0
  %127 = vmatpush1.bf16.msra.mxu0 0
  %128 = vmatprep.subr.bf16.mxu0 0
  %129 = vmatpush1.bf16.msra.mxu0 0
  %130 = vmatprep.subr.bf16.mxu0 0
  %131 = vmatpush1.bf16.msra.mxu0 0
  %132 = vmatprep.subr.bf16.mxu0 0
  %133 = vmatpush1.bf16.msra.mxu0 0
  %134 = vmatprep.subr.bf16.mxu0 0
  %135 = vmatpush1.bf16.msra.mxu0 0
  %136 = vmatprep.subr.bf16.mxu0 0
  %137 = vmatpush1.bf16.msra.mxu0 0
  %138 = vmatprep.mubr.bf16.mxu0 0
  %139 = vmatmul.mubr.bf16.gmra.mrb[0].mxu0 %v83
  %v140 = vpop.f32.mrb[0].mxu0
  %v141 = vadd.f32 %v54, %v140
  %v142 = vpop.f32.mrb[0].mxu0
  %v143 = vadd.f32 %v58, %v142
  %v144 = vpop.f32.mrb[0].mxu0
  %v145 = vadd.f32 %v54, %v144
  %v146 = vpop.f32.mrb[0].mxu0
  %v147 = vadd.f32 %v58, %v146
  %148 = vmatprep.mubr.bf16.mxu0 0
  %149 = vmatmul.mubr.bf16.gmra.mrb[0].mxu0 %v86
  %v150 = vpop.f32.mrb[0].mxu0
  %v151 = vadd.f32 %v54, %v150
  %v152 = vpop.f32.mrb[0].mxu0
  %v153 = vadd.f32 %v58, %v152
  %v154 = vpop.f32.mrb[0].mxu0
  %v155 = vadd.f32 %v54, %v154
  %v156 = vpop.f32.mrb[0].mxu0
  %v157 = vadd.f32 %v58, %v156
  %158 = vmatprep.mubr.bf16.mxu0 0
  %159 = vmatmul.mubr.bf16.gmra.mrb[0].mxu0 %v89
  %v160 = vpop.f32.mrb[0].mxu0
  %v161 = vadd.f32 %v54, %v160
  %v162 = vpop.f32.mrb[0].mxu0
  %v163 = vadd.f32 %v58, %v162
  %v164 = vpop.f32.mrb[0].mxu0
  %v165 = vadd.f32 %v54, %v164
  %v166 = vpop.f32.mrb[0].mxu0
  %v167 = vadd.f32 %v58, %v166
  %168 = vmatprep.mubr.bf16.mxu0 0
  %169 = vmatmul.mubr.bf16.gmra.mrb[0].mxu0 %v92
  %v170 = vpop.f32.mrb[0].mxu0
  %v171 = vadd.f32 %v54, %v170
  %v172 = vpop.f32.mrb[0].mxu0
  %v173 = vadd.f32 %v58, %v172
  %v174 = vpop.f32.mrb[0].mxu0
  %v175 = vadd.f32 %v54, %v174
  %v176 = vpop.f32.mrb[0].mxu0
  %v177 = vadd.f32 %v58, %v176
  %178 = vmatprep.mubr.bf16.mxu0 0
  %179 = vmatmul.mubr.bf16.gmra.mrb[0].mxu0 %v95
  %v180 = vpop.f32.mrb[0].mxu0
  %v181 = vadd.f32 %v54, %v180
  %v182 = vpop.f32.mrb[0].mxu0
  %v183 = vadd.f32 %v58, %v182
  %v184 = vpop.f32.mrb[0].mxu0
  %v185 = vadd.f32 %v54, %v184
  %v186 = vpop.f32.mrb[0].mxu0
  %v187 = vadd.f32 %v58, %v186
  %188 = vmatprep.mubr.bf16.mxu0 0
  %189 = vmatmul.mubr.bf16.gmra.mrb[0].mxu0 %v98
  %v190 = vpop.f32.mrb[0].mxu0
  %v191 = vadd.f32 %v54, %v190
  %v192 = vpop.f32.mrb[0].mxu0
  %v193 = vadd.f32 %v58, %v192
  %v194 = vpop.f32.mrb[0].mxu0
  %v195 = vadd.f32 %v54, %v194
  %v196 = vpop.f32.mrb[0].mxu0
  %v197 = vadd.f32 %v58, %v196
  %198 = vmatprep.mubr.bf16.mxu0 0
  %199 = vmatmul.mubr.bf16.gmra.mrb[0].mxu0 %v101
  %v200 = vpop.f32.mrb[0].mxu0
  %v201 = vadd.f32 %v54, %v200
  %v202 = vpop.f32.mrb[0].mxu0
  %v203 = vadd.f32 %v58, %v202
  %v204 = vpop.f32.mrb[0].mxu0
  %v205 = vadd.f32 %v54, %v204
  %v206 = vpop.f32.mrb[0].mxu0
  %v207 = vadd.f32 %v58, %v206
  %208 = vmatprep.mubr.bf16.mxu0 0
  %209 = vmatmul.mubr.bf16.gmra.mrb[0].mxu0 %v104
  %v210 = vpop.f32.mrb[0].mxu0
  %v211 = vadd.f32 %v54, %v210
  %v212 = vpop.f32.mrb[0].mxu0
  %v213 = vadd.f32 %v58, %v212
  %v214 = vpop.f32.mrb[0].mxu0
  %v215 = vadd.f32 %v54, %v214
  %v216 = vpop.f32.mrb[0].mxu0
  %v217 = vadd.f32 %v58, %v216
  %218 = vdwg.mxu0
  %v219 = vmax.f32 %v141, 0.0
  %v220 = vmax.f32 %v143, 0.0
  %v221 = vmax.f32 %v145, 0.0
  %v222 = vmax.f32 %v147, 0.0
  %v223 = vmax.f32 %v151, 0.0
  %v224 = vmax.f32 %v153, 0.0
  %v225 = vmax.f32 %v155, 0.0
  %v226 = vmax.f32 %v157, 0.0
  %v227 = vmax.f32 %v161, 0.0
  %v228 = vmax.f32 %v163, 0.0
  %v229 = vmax.f32 %v165, 0.0
  %v230 = vmax.f32 %v167, 0.0
  %v231 = vmax.f32 %v171, 0.0
  %v232 = vmax.f32 %v173, 0.0
  %v233 = vmax.f32 %v175, 0.0
  %v234 = vmax.f32 %v177, 0.0
  %v235 = vmax.f32 %v181, 0.0
  %v236 = vmax.f32 %v183, 0.0
  %v237 = vmax.f32 %v185, 0.0
  %v238 = vmax.f32 %v187, 0.0
  %v239 = vmax.f32 %v191, 0.0
  %v240 = vmax.f32 %v193, 0.0
  %v241 = vmax.f32 %v195, 0.0
  %v242 = vmax.f32 %v197, 0.0
  %v243 = vmax.f32 %v201, 0.0
  %v244 = vmax.f32 %v203, 0.0
  %v245 = vmax.f32 %v205, 0.0
  %v246 = vmax.f32 %v207, 0.0
  %v247 = vmax.f32 %v211, 0.0
  %v248 = vmax.f32 %v213, 0.0
  %v249 = vmax.f32 %v215, 0.0
  %v250 = vmax.f32 %v217, 0.0
  %v251 = vpack.c.bf16 %v221, %v219
  %v252 = vpack.c.bf16 %v222, %v220
  %v253 = vpack.c.bf16 %v225, %v223
  %v254 = vpack.c.bf16 %v226, %v224
  %v255 = vpack.c.bf16 %v229, %v227
  %v256 = vpack.c.bf16 %v230, %v228
  %v257 = vpack.c.bf16 %v233, %v231
  %v258 = vpack.c.bf16 %v234, %v232
  %v259 = vpack.c.bf16 %v237, %v235
  %v260 = vpack.c.bf16 %v238, %v236
  %v261 = vpack.c.bf16 %v241, %v239
  %v262 = vpack.c.bf16 %v242, %v240
  %v263 = vpack.c.bf16 %v245, %v243
  %v264 = vpack.c.bf16 %v246, %v244
  %v265 = vpack.c.bf16 %v249, %v247
  %v266 = vpack.c.bf16 %v250, %v248
  %v267 = vld [vmem:[%s3] sm:$0xf]
  %v268 = vld [vmem:[%s3 + $0x4] sm:$0xf]
  %v269 = vld [vmem:[%s3 + $0x8] sm:$0xf]
  %v270 = vld [vmem:[%s3 + $0xc] sm:$0xf]
  %v271 = vld [vmem:[%s3 + $0x10] sm:$0xf]
  %v272 = vld [vmem:[%s3 + $0x14] sm:$0xf]
  %v273 = vld [vmem:[%s3 + $0x18] sm:$0xf]
  %v274 = vld [vmem:[%s3 + $0x1c] sm:$0xf]
  %v275 = vld [vmem:[%s3 + $0x20] sm:$0xf]
  %v276 = vld [vmem:[%s3 + $0x24] sm:$0xf]
  %v277 = vld [vmem:[%s3 + $0x28] sm:$0xf]
  %v278 = vld [vmem:[%s3 + $0x2c] sm:$0xf]
  %v279 = vld [vmem:[%s3 + $0x30] sm:$0xf]
  %v280 = vld [vmem:[%s3 + $0x34] sm:$0xf]
  %v281 = vld [vmem:[%s3 + $0x38] sm:$0xf]
  %v282 = vld [vmem:[%s3 + $0x3c] sm:$0xf]
  %v283 = vld [vmem:[%s3 + $0x40] sm:$0xf]
  %v284 = vld [vmem:[%s3 + $0x44] sm:$0xf]
  %v285 = vld [vmem:[%s3 + $0x48] sm:$0xf]
  %v286 = vld [vmem:[%s3 + $0x4c] sm:$0xf]
  %v287 = vld [vmem:[%s3 + $0x50] sm:$0xf]
  %v288 = vld [vmem:[%s3 + $0x54] sm:$0xf]
  %v289 = vld [vmem:[%s3 + $0x58] sm:$0xf]
  %v290 = vld [vmem:[%s3 + $0x5c] sm:$0xf]
  %v291 = vld [vmem:[%s3 + $0x60] sm:$0xf]
  %v292 = vld [vmem:[%s3 + $0x64] sm:$0xf]
  %v293 = vld [vmem:[%s3 + $0x68] sm:$0xf]
  %v294 = vld [vmem:[%s3 + $0x6c] sm:$0xf]
  %v295 = vld [vmem:[%s3 + $0x70] sm:$0xf]
  %v296 = vld [vmem:[%s3 + $0x74] sm:$0xf]
  %v297 = vld [vmem:[%s3 + $0x78] sm:$0xf]
  %v298 = vld [vmem:[%s3 + $0x7c] sm:$0xf]
  %v299 = vld [vmem:[%s4] sm:$0x1]
  %v301 = vlaneseq
  %v302 = vshrl.u32 %v301, 7
  %v303 = vsub.s32 0, %v302
  %v304 = vrot.slane %v299, %v303
  %v338 = vunpack.c.l.b16 %v267
  %v339 = vunpack.c.l.b16 %v268
  %v340 = vunpack.c.l.b16 %v269
  %v341 = vunpack.c.l.b16 %v270
  %v342 = vunpack.c.l.b16 %v271
  %v343 = vunpack.c.l.b16 %v272
  %v344 = vunpack.c.l.b16 %v273
  %v345 = vunpack.c.l.b16 %v274
  %v346 = vunpack.c.l.b16 %v275
  %v347 = vunpack.c.l.b16 %v276
  %v348 = vunpack.c.l.b16 %v277
  %v349 = vunpack.c.l.b16 %v278
  %v350 = vunpack.c.l.b16 %v279
  %v351 = vunpack.c.l.b16 %v280
  %v352 = vunpack.c.l.b16 %v281
  %v353 = vunpack.c.l.b16 %v282
  %v354 = vunpack.c.l.b16 %v283
  %v355 = vunpack.c.l.b16 %v284
  %v356 = vunpack.c.l.b16 %v285
  %v357 = vunpack.c.l.b16 %v286
  %v358 = vunpack.c.l.b16 %v287
  %v359 = vunpack.c.l.b16 %v288
  %v360 = vunpack.c.l.b16 %v289
  %v361 = vunpack.c.l.b16 %v290
  %v362 = vunpack.c.l.b16 %v291
  %v363 = vunpack.c.l.b16 %v292
  %v364 = vunpack.c.l.b16 %v293
  %v365 = vunpack.c.l.b16 %v294
  %v366 = vunpack.c.l.b16 %v295
  %v367 = vunpack.c.l.b16 %v296
  %v368 = vunpack.c.l.b16 %v297
  %v369 = vunpack.c.l.b16 %v298
  %v370 = vpack.c.b16 %v339, %v338
  %v371 = vpack.c.b16 %v341, %v340
  %v372 = vpack.c.b16 %v343, %v342
  %v373 = vpack.c.b16 %v345, %v344
  %v374 = vpack.c.b16 %v347, %v346
  %v375 = vpack.c.b16 %v349, %v348
  %v376 = vpack.c.b16 %v351, %v350
  %v377 = vpack.c.b16 %v353, %v352
  %v378 = vpack.c.b16 %v355, %v354
  %v379 = vpack.c.b16 %v357, %v356
  %v380 = vpack.c.b16 %v359, %v358
  %v381 = vpack.c.b16 %v361, %v360
  %v382 = vpack.c.b16 %v363, %v362
  %v383 = vpack.c.b16 %v365, %v364
  %v384 = vpack.c.b16 %v367, %v366
  %v385 = vpack.c.b16 %v369, %v368
  %402 = vmatprep.subr.bf16.mxu0 0
  %403 = vmatpush1.bf16.msra.mxu0 %v370
  %404 = vmatprep.subr.bf16.mxu0 0
  %405 = vmatpush1.bf16.msra.mxu0 %v371
  %406 = vmatprep.subr.bf16.mxu0 0
  %407 = vmatpush1.bf16.msra.mxu0 %v372
  %408 = vmatprep.subr.bf16.mxu0 0
  %409 = vmatpush1.bf16.msra.mxu0 %v373
  %410 = vmatprep.subr.bf16.mxu0 0
  %411 = vmatpush1.bf16.msra.mxu0 %v374
  %412 = vmatprep.subr.bf16.mxu0 0
  %413 = vmatpush1.bf16.msra.mxu0 %v375
  %414 = vmatprep.subr.bf16.mxu0 0
  %415 = vmatpush1.bf16.msra.mxu0 %v376
  %416 = vmatprep.subr.bf16.mxu0 0
  %417 = vmatpush1.bf16.msra.mxu0 %v377
  %418 = vmatprep.subr.bf16.mxu0 0
  %419 = vmatpush1.bf16.msra.mxu0 %v378
  %420 = vmatprep.subr.bf16.mxu0 0
  %421 = vmatpush1.bf16.msra.mxu0 %v379
  %422 = vmatprep.subr.bf16.mxu0 0
  %423 = vmatpush1.bf16.msra.mxu0 %v380
  %424 = vmatprep.subr.bf16.mxu0 0
  %425 = vmatpush1.bf16.msra.mxu0 %v381
  %426 = vmatprep.subr.bf16.mxu0 0
  %427 = vmatpush1.bf16.msra.mxu0 %v382
  %428 = vmatprep.subr.bf16.mxu0 0
  %429 = vmatpush1.bf16.msra.mxu0 %v383
  %430 = vmatprep.subr.bf16.mxu0 0
  %431 = vmatpush1.bf16.msra.mxu0 %v384
  %432 = vmatprep.subr.bf16.mxu0 0
  %433 = vmatpush1.bf16.msra.mxu0 %v385
  %434 = vmatprep.mubr.bf16.mxu0 %v252
  %435 = vmatmul.mubr.bf16.gmra.mrb[0].mxu0 %v251
  %v436 = vpop.f32.mrb[0].mxu0
  %v437 = vadd.f32 %v304, %v436
  %v438 = vpop.f32.mrb[0].mxu0
  %v439 = vpop.f32.mrb[0].mxu0
  %v440 = vadd.f32 %v304, %v439
  %v441 = vpop.f32.mrb[0].mxu0
  %442 = vmatprep.mubr.bf16.mxu0 %v254
  %443 = vmatmul.mubr.bf16.gmra.mrb[0].mxu0 %v253
  %v444 = vpop.f32.mrb[0].mxu0
  %v445 = vadd.f32 %v304, %v444
  %v446 = vpop.f32.mrb[0].mxu0
  %v447 = vpop.f32.mrb[0].mxu0
  %v448 = vadd.f32 %v304, %v447
  %v449 = vpop.f32.mrb[0].mxu0
  %450 = vmatprep.mubr.bf16.mxu0 %v256
  %451 = vmatmul.mubr.bf16.gmra.mrb[0].mxu0 %v255
  %v452 = vpop.f32.mrb[0].mxu0
  %v453 = vadd.f32 %v304, %v452
  %v454 = vpop.f32.mrb[0].mxu0
  %v455 = vpop.f32.mrb[0].mxu0
  %v456 = vadd.f32 %v304, %v455
  %v457 = vpop.f32.mrb[0].mxu0
  %458 = vmatprep.mubr.bf16.mxu0 %v258
  %459 = vmatmul.mubr.bf16.gmra.mrb[0].mxu0 %v257
  %v460 = vpop.f32.mrb[0].mxu0
  %v461 = vadd.f32 %v304, %v460
  %v462 = vpop.f32.mrb[0].mxu0
  %v463 = vpop.f32.mrb[0].mxu0
  %v464 = vadd.f32 %v304, %v463
  %v465 = vpop.f32.mrb[0].mxu0
  %466 = vmatprep.mubr.bf16.mxu0 %v260
  %467 = vmatmul.mubr.bf16.gmra.mrb[0].mxu0 %v259
  %v468 = vpop.f32.mrb[0].mxu0
  %v469 = vadd.f32 %v304, %v468
  %v470 = vpop.f32.mrb[0].mxu0
  %v471 = vpop.f32.mrb[0].mxu0
  %v472 = vadd.f32 %v304, %v471
  %v473 = vpop.f32.mrb[0].mxu0
  %474 = vmatprep.mubr.bf16.mxu0 %v262
  %475 = vmatmul.mubr.bf16.gmra.mrb[0].mxu0 %v261
  %v476 = vpop.f32.mrb[0].mxu0
  %v477 = vadd.f32 %v304, %v476
  %v478 = vpop.f32.mrb[0].mxu0
  %v479 = vpop.f32.mrb[0].mxu0
  %v480 = vadd.f32 %v304, %v479
  %v481 = vpop.f32.mrb[0].mxu0
  %482 = vmatprep.mubr.bf16.mxu0 %v264
  %483 = vmatmul.mubr.bf16.gmra.mrb[0].mxu0 %v263
  %v484 = vpop.f32.mrb[0].mxu0
  %v485 = vadd.f32 %v304, %v484
  %v486 = vpop.f32.mrb[0].mxu0
  %v487 = vpop.f32.mrb[0].mxu0
  %v488 = vadd.f32 %v304, %v487
  %v489 = vpop.f32.mrb[0].mxu0
  %490 = vmatprep.mubr.bf16.mxu0 %v266
  %491 = vmatmul.mubr.bf16.gmra.mrb[0].mxu0 %v265
  %v492 = vpop.f32.mrb[0].mxu0
  %v493 = vadd.f32 %v304, %v492
  %v494 = vpop.f32.mrb[0].mxu0
  %v495 = vpop.f32.mrb[0].mxu0
  %v496 = vadd.f32 %v304, %v495
  %v497 = vpop.f32.mrb[0].mxu0
  %498 = vdwg.mxu0
  %vm499 = vcmask 31744
  %500 = vst.msk [vmem:[%s5] sm:$0xff] %vm499, %v437
  %501 = vst.msk [vmem:[%s5 + $0x8] sm:$0xff] %vm499, %v440
  %502 = vst.msk [vmem:[%s5 + $0x10] sm:$0xff] %vm499, %v445
  %503 = vst.msk [vmem:[%s5 + $0x18] sm:$0xff] %vm499, %v448
  %504 = vst.msk [vmem:[%s5 + $0x20] sm:$0xff] %vm499, %v453
  %505 = vst.msk [vmem:[%s5 + $0x28] sm:$0xff] %vm499, %v456
  %506 = vst.msk [vmem:[%s5 + $0x30] sm:$0xff] %vm499, %v461
  %507 = vst.msk [vmem:[%s5 + $0x38] sm:$0xff] %vm499, %v464
  %508 = vst.msk [vmem:[%s5 + $0x40] sm:$0xff] %vm499, %v469
  %509 = vst.msk [vmem:[%s5 + $0x48] sm:$0xff] %vm499, %v472
  %510 = vst.msk [vmem:[%s5 + $0x50] sm:$0xff] %vm499, %v477
  %511 = vst.msk [vmem:[%s5 + $0x58] sm:$0xff] %vm499, %v480
  %512 = vst.msk [vmem:[%s5 + $0x60] sm:$0xff] %vm499, %v485
  %513 = vst.msk [vmem:[%s5 + $0x68] sm:$0xff] %vm499, %v488
  %514 = vst.msk [vmem:[%s5 + $0x70] sm:$0xff] %vm499, %v493
  %515 = vst.msk [vmem:[%s5 + $0x78] sm:$0xff] %vm499, %v496
  // Predicated region
  $region22: #{tpu_custom_call.1} parent=0 // pred_check
    _
  $region23: #{tpu_custom_call.1} parent=0 // pred_check_branch
    %517 = sbr.rel (0) target = $region25
  $region24: #{tpu_custom_call.1} parent=0 // pred_region
    _
  $region25: #{tpu_custom_call.1} parent=0 // pred_fallthru
    _
  // Predicated region
  $region26: #{tpu_custom_call.1} parent=0 // pred_check
    _
  $region27: #{tpu_custom_call.1} parent=0 // pred_check_branch
    %519 = sbr.rel (0) target = $region29
  $region28: #{tpu_custom_call.1} parent=0 // pred_region
    _
  $region29: #{tpu_custom_call.1} parent=0 // pred_fallthru
    _

</llo_original>
